<compile_context>
chip_gen: v6e
topology: v6e:2x2x1
jax: 0.10.0
libtpu: 0.0.40
codegen_flags: <defaults>
</compile_context>

<pallas_src>
import math
import functools

import jax
import jax.numpy as jnp
from jax.experimental import pallas as pl
from jax.experimental.pallas import tpu as pltpu


def _round_up(x, m):
    return ((x + m - 1) // m) * m


def _cdiv(a, b):
    return -(-a // b)


# ----------------------------------------------------------------------------
# Kernel
# ----------------------------------------------------------------------------
def path_gru_kernel(new_ref, old_ref,
                    wg1_ref, bg1_ref, wg2_ref, bg2_ref,
                    w1_ref, w2_ref, b12_ref,
                    out_ref):
    H = out_ref.shape[-1]
    Gw = wg2_ref.shape[-1] // 2            # lane-replication width of the gate head
    wdt = wg1_ref.dtype                    # MXU operand dtype (f32 or bf16)

    newf = new_ref[...].astype(jnp.float32)
    oldf = old_ref[...].astype(jnp.float32)
    new_m = new_ref[...].astype(wdt)
    old_m = old_ref[...].astype(wdt)

    # Gate-independent matmuls: old @ W1 and new @ W2.  No dependency on the
    # sigmoid chain, so the scheduler can overlap them with the gate matmuls.
    p1 = jnp.dot(old_m, w1_ref[...], preferred_element_type=jnp.float32)   # (TM, H)
    p2 = jnp.dot(new_m, w2_ref[...], preferred_element_type=jnp.float32)   # (TM, H)

    # gate = sigmoid(Linear2(ReLU(Linear1(new - old))))
    # wg2 is lane-replicated to (H, 2*Gw): cols [0:Gw) = reset, [Gw:2Gw) = update.
    diff = (newf - oldf).astype(wdt)
    h = jnp.dot(diff, wg1_ref[...], preferred_element_type=jnp.float32) + bg1_ref[...]
    h = jnp.maximum(h, 0.0)
    logits = jnp.dot(h.astype(wdt), wg2_ref[...],
                     preferred_element_type=jnp.float32) + bg2_ref[...]
    gate = jax.nn.sigmoid(logits)                                          # (TM, 2*Gw)

    if Gw == H:
        # Gate already broadcast across all H lanes by the replicated head.
        reset_b = gate[:, :H]
        update_b = gate[:, H:]
    else:
        # H > 128: replicate only to 128 lanes per gate; one lane broadcast each.
        reset_b = jnp.broadcast_to(gate[:, 0:1], oldf.shape)
        update_b = jnp.broadcast_to(gate[:, Gw:Gw + 1], oldf.shape)

    # res = fc1(reset*old) + fc2(new) == reset*(old@W1) + new@W2 + (b1 + b2)
    # (biases are NOT scaled by reset -- they were outside the product).
    res = reset_b * p1 + (p2 + b12_ref[...])

    # out = (1 - u) * old + u * res == old + u * (res - old)
    out_ref[...] = (oldf + update_b * (res - oldf)).astype(out_ref.dtype)


# ----------------------------------------------------------------------------
# Host-side wrapper
# ----------------------------------------------------------------------------
def path_gru_forward(new, old, kparams, *, tile_m=512, out_dtype=None,
                     cast_inputs=None):
    """new, old: (B, S, H).  kparams: output of prepare_params()."""
    B, S, H = new.shape
    M = B * S

    wdt = kparams["wg1"].dtype
    use_bf16 = (wdt == jnp.bfloat16)
    Gw = kparams["wg2"].shape[-1] // 2

    # Activations in HBM: bf16 by default when weights are bf16 (bandwidth win).
    # cast_inputs=False keeps them f32 (only MXU operands cast) if the bf16
    # quantization of `new - old` in the gate path is a concern.
    if cast_inputs is None:
        cast_inputs = use_bf16
    in_dtype = jnp.bfloat16 if (use_bf16 and cast_inputs) else new.dtype
    if out_dtype is None:
        out_dtype = jnp.bfloat16 if use_bf16 else new.dtype

    # ---- row tile: >=8 grid steps when M allows (double-buffered pipeline,
    # >=4 steps per TensorCore on v7x), tm in the 256-1024 range for big M,
    # rounded to 16 rows for bf16 / 8 for f32.
    row_align = 16 if in_dtype == jnp.bfloat16 else 8
    target_steps = 8
    cap = max(row_align, _round_up(_cdiv(M, target_steps), row_align))
    tm = max(row_align, _round_up(min(int(tile_m), cap), row_align))
    Mp = _round_up(M, tm)
    grid = (Mp // tm,)

    new2 = new.reshape(M, H).astype(in_dtype)
    old2 = old.reshape(M, H).astype(in_dtype)
    if Mp != M:
        pad = ((0, Mp - M), (0, 0))
        new2 = jnp.pad(new2, pad)
        old2 = jnp.pad(old2, pad)

    # ---- VMEM budget: derive from actual buffers, cap at 3/4 of physical
    # VMEM (v7x: 64 MiB/core -> 48 MiB; v5e/v6e: 128 MiB -> 96 MiB).
    act_b = jnp.dtype(in_dtype).itemsize
    out_b = jnp.dtype(out_dtype).itemsize
    w_b = jnp.dtype(wdt).itemsize
    weight_bytes = (3 * H * H + H * 2 * Gw) * w_b + (H + 2 * Gw + H) * 4
    row_bytes = 2 * tm * H * (2 * act_b + out_b)          # double-buffered tiles
    inter_bytes = 8 * tm * H * 4                          # f32 temporaries
    needed = int(1.5 * (row_bytes + weight_bytes + inter_bytes)) + (4 << 20)
    try:
        phys_vmem = int(pltpu.get_tpu_info().vmem_capacity_bytes)
    except Exception:
        phys_vmem = 64 << 20                              # conservative (v7x)
    hard_cap = (phys_vmem * 3) // 4
    vmem_limit = min(max(needed, 32 << 20), hard_cap)

    row_spec = pl.BlockSpec((tm, H), lambda i: (i, 0))
    # Whole-array VMEM residents: not part of the row pipeline, so the
    # weights/biases are not double-buffered per grid step.
    wspec = pl.BlockSpec(memory_space=pltpu.MemorySpace.VMEM)

    cost = pl.CostEstimate(
        flops=2 * Mp * H * (3 * H + 2 * Gw),
        transcendentals=Mp * 2 * Gw,
        bytes_accessed=Mp * H * (2 * act_b + out_b) + weight_bytes,
    )

    out2 = pl.pallas_call(
        path_gru_kernel,
        out_shape=jax.ShapeDtypeStruct((Mp, H), out_dtype),
        grid_spec=pltpu.PrefetchScalarGridSpec(
            num_scalar_prefetch=0,
            grid=grid,
            in_specs=[
                row_spec,        # new
                row_spec,        # old
                wspec,           # wg1   (H, H)
                wspec,           # bg1   (1, H)
                wspec,           # wg2   (H, 2*Gw) lane-replicated gate head
                wspec,           # bg2   (1, 2*Gw)
                wspec,           # w1    (H, H)
                wspec,           # w2    (H, H)
                wspec,           # b12   (1, H)  == b1 + b2
            ],
            out_specs=row_spec,
        ),
        compiler_params=pltpu.CompilerParams(
            dimension_semantics=("parallel",),
            vmem_limit_bytes=vmem_limit,
        ),
        cost_estimate=cost,
    )(new2, old2,
      kparams["wg1"], kparams["bg1"], kparams["wg2"], kparams["bg2"],
      kparams["w1"], kparams["w2"], kparams["b12"])

    return out2[:M].reshape(B, S, H)


# ----------------------------------------------------------------------------
# One-time parameter preparation (hoisted out of the per-call forward)
# ----------------------------------------------------------------------------
def prepare_params(raw, *, use_bf16=True):
    """Replicate the gate head, fold fc biases, and cast weights once."""
    H = raw["wg1"].shape[0]
    Gw = min(H, 128)
    wdt = jnp.bfloat16 if use_bf16 else jnp.float32

    wg2_rep = jnp.concatenate([jnp.tile(raw["wg2"][:, 0:1], (1, Gw)),
                               jnp.tile(raw["wg2"][:, 1:2], (1, Gw))], axis=1)
    bg2_rep = jnp.concatenate([jnp.tile(raw["bg2"][:, 0:1], (1, Gw)),
                               jnp.tile(raw["bg2"][:, 1:2], (1, Gw))], axis=1)
    return {
        "wg1": raw["wg1"].astype(wdt),
        "bg1": raw["bg1"].astype(jnp.float32),       # biases stay f32
        "wg2": wg2_rep.astype(wdt),
        "bg2": bg2_rep.astype(jnp.float32),
        "w1": raw["w1"].astype(wdt),
        "w2": raw["w2"].astype(wdt),
        "b12": (raw["b1"] + raw["b2"]).astype(jnp.float32),
    }


def init_params(key, num_hid):
    """nn.Linear-style U(-1/sqrt(fan_in), 1/sqrt(fan_in)) init.
    Weights stored pre-transposed as (in_features, out_features)."""
    ks = jax.random.split(key, 8)
    bound = 1.0 / math.sqrt(num_hid)

    def u(k, shape):
        return jax.random.uniform(k, shape, jnp.float32, -bound, bound)

    return {
        "wg1": u(ks[0], (num_hid, num_hid)), "bg1": u(ks[1], (1, num_hid)),
        "wg2": u(ks[2], (num_hid, 2)),       "bg2": u(ks[3], (1, 2)),
        "w1":  u(ks[4], (num_hid, num_hid)), "b1":  u(ks[5], (1, num_hid)),
        "w2":  u(ks[6], (num_hid, num_hid)), "b2":  u(ks[7], (1, num_hid)),
    }


def path_gru_reference(new, old, params):
    """Pure-JAX reference mirroring the PyTorch forward."""
    diff = new - old
    h = jnp.maximum(diff @ params["wg1"] + params["bg1"], 0.0)
    gate = jax.nn.sigmoid(h @ params["wg2"] + params["bg2"])
    reset_gate = gate[..., 0:1]
    update_gate = gate[..., 1:2]
    res = (reset_gate * old) @ params["w1"] + params["b1"] + new @ params["w2"] + params["b2"]
    return (1.0 - update_gate) * old + update_gate * res


if __name__ == "__main__":
    B, S, H = 2, 8, 128   # small shapes; H is Path_GRU's num_hid

    key = jax.random.PRNGKey(0)
    k_new, k_old, k_par = jax.random.split(key, 3)

    new = jax.random.normal(k_new, (B, S, H), jnp.float32)
    old = jax.random.normal(k_old, (B, S, H), jnp.float32)
    raw = init_params(k_par, H)
    ref = path_gru_reference(new, old, raw)

    # 1) Strict semantic check against the PyTorch-equivalent reference (f32).
    p32 = prepare_params(raw, use_bf16=False)
    fwd32 = jax.jit(functools.partial(path_gru_forward, tile_m=512))
    out32 = jax.block_until_ready(fwd32(new, old, p32))
    assert out32.shape == (B, S, H)
    assert out32.dtype == jnp.float32
    assert jnp.allclose(out32, ref, atol=1e-4, rtol=1e-4), "f32 mismatch vs reference"

    # 2) Production default: bf16 weights/activations/output, f32 accumulation.
    p16 = prepare_params(raw, use_bf16=True)
    fwd16 = jax.jit(functools.partial(path_gru_forward, tile_m=512))
    out16 = jax.block_until_ready(fwd16(new, old, p16))
    assert out16.shape == (B, S, H)
    assert out16.dtype == jnp.bfloat16
    err16 = float(jnp.max(jnp.abs(out16.astype(jnp.float32) - ref)))
    assert jnp.isfinite(err16) and err16 < 0.15, f"bf16 path error too large: {err16}"

    print("KERNEL_OK")
</pallas_src>

<mosaic_0001>
module attributes {stable_mosaic.version = 11 : i64} {
  func.func @path_gru_kernel(%arg0: i32, %arg1: memref<8x128xf32, #tpu.memory_space<vmem>>, %arg2: memref<8x128xf32, #tpu.memory_space<vmem>>, %arg3: memref<128x128xf32, #tpu.memory_space<vmem>>, %arg4: memref<1x128xf32, #tpu.memory_space<vmem>>, %arg5: memref<128x256xf32, #tpu.memory_space<vmem>>, %arg6: memref<1x256xf32, #tpu.memory_space<vmem>>, %arg7: memref<128x128xf32, #tpu.memory_space<vmem>>, %arg8: memref<128x128xf32, #tpu.memory_space<vmem>>, %arg9: memref<1x128xf32, #tpu.memory_space<vmem>>, %arg10: memref<8x128xf32, #tpu.memory_space<vmem>>) attributes {dimension_semantics = [#tpu.dimension_semantics<parallel>], iteration_bounds = array<i64: 2>, scalar_prefetch = 0 : i64, scratch_operands = 0 : i64, tpu.core_type = #tpu.core_type<tc>, window_params = [{transform_indices = @transform_0, window_bounds = array<i64: 8, 128>}, {transform_indices = @transform_1, window_bounds = array<i64: 8, 128>}, {pipeline_mode = #tpu.pipeline_mode<synchronous>, transform_indices = @transform_2, window_bounds = array<i64: 128, 128>}, {pipeline_mode = #tpu.pipeline_mode<synchronous>, transform_indices = @transform_3, window_bounds = array<i64: 1, 128>}, {pipeline_mode = #tpu.pipeline_mode<synchronous>, transform_indices = @transform_4, window_bounds = array<i64: 128, 256>}, {pipeline_mode = #tpu.pipeline_mode<synchronous>, transform_indices = @transform_5, window_bounds = array<i64: 1, 256>}, {pipeline_mode = #tpu.pipeline_mode<synchronous>, transform_indices = @transform_6, window_bounds = array<i64: 128, 128>}, {pipeline_mode = #tpu.pipeline_mode<synchronous>, transform_indices = @transform_7, window_bounds = array<i64: 128, 128>}, {pipeline_mode = #tpu.pipeline_mode<synchronous>, transform_indices = @transform_8, window_bounds = array<i64: 1, 128>}, {transform_indices = @transform_9, window_bounds = array<i64: 8, 128>}]} {
    %c0 = arith.constant 0 : index
    %c0_0 = arith.constant 0 : index
    %0 = vector.load %arg1[%c0, %c0_0] : memref<8x128xf32, #tpu.memory_space<vmem>>, vector<8x128xf32>
    %c0_1 = arith.constant 0 : index
    %c0_2 = arith.constant 0 : index
    %1 = vector.load %arg2[%c0_1, %c0_2] : memref<8x128xf32, #tpu.memory_space<vmem>>, vector<8x128xf32>
    %c0_3 = arith.constant 0 : index
    %c0_4 = arith.constant 0 : index
    %2 = vector.load %arg1[%c0_3, %c0_4] : memref<8x128xf32, #tpu.memory_space<vmem>>, vector<8x128xf32>
    %c0_5 = arith.constant 0 : index
    %c0_6 = arith.constant 0 : index
    %3 = vector.load %arg2[%c0_5, %c0_6] : memref<8x128xf32, #tpu.memory_space<vmem>>, vector<8x128xf32>
    %c0_7 = arith.constant 0 : index
    %c0_8 = arith.constant 0 : index
    %4 = vector.load %arg7[%c0_7, %c0_8] : memref<128x128xf32, #tpu.memory_space<vmem>>, vector<128x128xf32>
    %cst = arith.constant dense<0.000000e+00> : vector<8x128xf32>
    %5 = tpu.matmul %3, %4, %cst {dimension_numbers = #tpu.dot_dimension_numbers<[1], [0], [0], [1], [0, 0, 1, 1], [], []>} : vector<8x128xf32>, vector<128x128xf32>, vector<8x128xf32> -> vector<8x128xf32>
    %c0_9 = arith.constant 0 : index
    %c0_10 = arith.constant 0 : index
    %6 = vector.load %arg8[%c0_9, %c0_10] : memref<128x128xf32, #tpu.memory_space<vmem>>, vector<128x128xf32>
    %cst_11 = arith.constant dense<0.000000e+00> : vector<8x128xf32>
    %7 = tpu.matmul %2, %6, %cst_11 {dimension_numbers = #tpu.dot_dimension_numbers<[1], [0], [0], [1], [0, 0, 1, 1], [], []>} : vector<8x128xf32>, vector<128x128xf32>, vector<8x128xf32> -> vector<8x128xf32>
    %8 = arith.subf %0, %1 : vector<8x128xf32>
    %c0_12 = arith.constant 0 : index
    %c0_13 = arith.constant 0 : index
    %9 = vector.load %arg3[%c0_12, %c0_13] : memref<128x128xf32, #tpu.memory_space<vmem>>, vector<128x128xf32>
    %cst_14 = arith.constant dense<0.000000e+00> : vector<8x128xf32>
    %10 = tpu.matmul %8, %9, %cst_14 {dimension_numbers = #tpu.dot_dimension_numbers<[1], [0], [0], [1], [0, 0, 1, 1], [], []>} : vector<8x128xf32>, vector<128x128xf32>, vector<8x128xf32> -> vector<8x128xf32>
    %c0_15 = arith.constant 0 : index
    %c0_16 = arith.constant 0 : index
    %11 = vector.load %arg4[%c0_15, %c0_16] : memref<1x128xf32, #tpu.memory_space<vmem>>, vector<1x128xf32>
    %12 = vector.broadcast %11 : vector<1x128xf32> to vector<8x128xf32>
    %13 = arith.addf %10, %12 : vector<8x128xf32>
    %cst_17 = arith.constant 0.000000e+00 : f32
    %14 = vector.broadcast %cst_17 : f32 to vector<8x128xf32>
    %15 = arith.maximumf %13, %14 : vector<8x128xf32>
    %c0_18 = arith.constant 0 : index
    %c0_19 = arith.constant 0 : index
    %16 = vector.load %arg5[%c0_18, %c0_19] : memref<128x256xf32, #tpu.memory_space<vmem>>, vector<128x256xf32>
    %cst_20 = arith.constant dense<0.000000e+00> : vector<8x256xf32>
    %17 = tpu.matmul %15, %16, %cst_20 {dimension_numbers = #tpu.dot_dimension_numbers<[1], [0], [0], [1], [0, 0, 1, 1], [], []>} : vector<8x128xf32>, vector<128x256xf32>, vector<8x256xf32> -> vector<8x256xf32>
    %c0_21 = arith.constant 0 : index
    %c0_22 = arith.constant 0 : index
    %18 = vector.load %arg6[%c0_21, %c0_22] : memref<1x256xf32, #tpu.memory_space<vmem>>, vector<1x256xf32>
    %19 = vector.broadcast %18 : vector<1x256xf32> to vector<8x256xf32>
    %20 = arith.addf %17, %19 : vector<8x256xf32>
    %21 = arith.negf %20 : vector<8x256xf32>
    %22 = math.exp %21 : vector<8x256xf32>
    %cst_23 = arith.constant 1.000000e+00 : f32
    %23 = vector.broadcast %cst_23 : f32 to vector<8x256xf32>
    %24 = arith.addf %23, %22 : vector<8x256xf32>
    %25 = arith.divf %23, %24 : vector<8x256xf32>
    %26 = vector.extract_strided_slice %25 {offsets = [0, 0], sizes = [8, 128], strides = [1, 1]} : vector<8x256xf32> to vector<8x128xf32>
    %27 = vector.extract_strided_slice %25 {offsets = [0, 128], sizes = [8, 128], strides = [1, 1]} : vector<8x256xf32> to vector<8x128xf32>
    %28 = arith.mulf %26, %5 : vector<8x128xf32>
    %c0_24 = arith.constant 0 : index
    %c0_25 = arith.constant 0 : index
    %29 = vector.load %arg9[%c0_24, %c0_25] : memref<1x128xf32, #tpu.memory_space<vmem>>, vector<1x128xf32>
    %30 = vector.broadcast %29 : vector<1x128xf32> to vector<8x128xf32>
    %31 = arith.addf %7, %30 : vector<8x128xf32>
    %32 = arith.addf %28, %31 : vector<8x128xf32>
    %33 = arith.subf %32, %1 : vector<8x128xf32>
    %34 = arith.mulf %27, %33 : vector<8x128xf32>
    %35 = arith.addf %1, %34 : vector<8x128xf32>
    %c0_26 = arith.constant 0 : index
    %c0_27 = arith.constant 0 : index
    %36 = vector.load %arg10[%c0_26, %c0_27] : memref<8x128xf32, #tpu.memory_space<vmem>>, vector<8x128xf32>
    tpu.vector_store %arg10[%c0_26, %c0_27], %35 {strides = array<i32>} : memref<8x128xf32, #tpu.memory_space<vmem>>, vector<8x128xf32>,
    return
  }
  func.func @transform_0(%arg0: i32) -> (i32, i32) {
    %c0_i32 = arith.constant 0 : i32
    %c0_i32_0 = arith.constant 0 : i32
    return %arg0, %c0_i32 : i32, i32
  }
  func.func @transform_1(%arg0: i32) -> (i32, i32) {
    %c0_i32 = arith.constant 0 : i32
    %c0_i32_0 = arith.constant 0 : i32
    return %arg0, %c0_i32 : i32, i32
  }
  func.func @transform_2(%arg0: i32) -> (i32, i32) {
    %c0_i32 = arith.constant 0 : i32
    %c0_i32_0 = arith.constant 0 : i32
    %c0_i32_1 = arith.constant 0 : i32
    return %c0_i32, %c0_i32_0 : i32, i32
  }
  func.func @transform_3(%arg0: i32) -> (i32, i32) {
    %c0_i32 = arith.constant 0 : i32
    %c0_i32_0 = arith.constant 0 : i32
    %c0_i32_1 = arith.constant 0 : i32
    return %c0_i32, %c0_i32_0 : i32, i32
  }
  func.func @transform_4(%arg0: i32) -> (i32, i32) {
    %c0_i32 = arith.constant 0 : i32
    %c0_i32_0 = arith.constant 0 : i32
    %c0_i32_1 = arith.constant 0 : i32
    return %c0_i32, %c0_i32_0 : i32, i32
  }
  func.func @transform_5(%arg0: i32) -> (i32, i32) {
    %c0_i32 = arith.constant 0 : i32
    %c0_i32_0 = arith.constant 0 : i32
    %c0_i32_1 = arith.constant 0 : i32
    return %c0_i32, %c0_i32_0 : i32, i32
  }
  func.func @transform_6(%arg0: i32) -> (i32, i32) {
    %c0_i32 = arith.constant 0 : i32
    %c0_i32_0 = arith.constant 0 : i32
    %c0_i32_1 = arith.constant 0 : i32
    return %c0_i32, %c0_i32_0 : i32, i32
  }
  func.func @transform_7(%arg0: i32) -> (i32, i32) {
    %c0_i32 = arith.constant 0 : i32
    %c0_i32_0 = arith.constant 0 : i32
    %c0_i32_1 = arith.constant 0 : i32
    return %c0_i32, %c0_i32_0 : i32, i32
  }
  func.func @transform_8(%arg0: i32) -> (i32, i32) {
    %c0_i32 = arith.constant 0 : i32
    %c0_i32_0 = arith.constant 0 : i32
    %c0_i32_1 = arith.constant 0 : i32
    return %c0_i32, %c0_i32_0 : i32, i32
  }
  func.func @transform_9(%arg0: i32) -> (i32, i32) {
    %c0_i32 = arith.constant 0 : i32
    %c0_i32_0 = arith.constant 0 : i32
    return %arg0, %c0_i32 : i32, i32
  }
}

</mosaic_0001>

<llo_original>
// kernel: path_gru_forward.1
$region0: #{path_gru_forward.1}
  #allocation0 [shape = 'u32[]', space=smem, size = 0x4, offset = 0x4, fixed_abs, tag = 'smem constant byte address 0x4 - core index']
  #allocation1 [shape = 'u32[144,128]{1,0:T(1,128)}', space=vmem, size = 0x12000, scoped, tag = 'internal scratch']
  %s0 = inlined_call_operand.hbm [shape: f32[16,128], index: 0, kind: input, shape index: {}]
  %s1 = inlined_call_operand.hbm [shape: f32[16,128], index: 1, kind: input, shape index: {}]
  %s2 = inlined_call_operand.hbm [shape: f32[128,128], index: 2, kind: input, shape index: {}]
  %s3 = inlined_call_operand.vmem [shape: f32[1,128], index: 3, kind: input, shape index: {}]
  %s4 = inlined_call_operand.hbm [shape: f32[128,256], index: 4, kind: input, shape index: {}]
  %s5 = inlined_call_operand.vmem [shape: f32[1,256], index: 5, kind: input, shape index: {}]
  %s6 = inlined_call_operand.hbm [shape: f32[128,128], index: 6, kind: input, shape index: {}]
  %s7 = inlined_call_operand.hbm [shape: f32[128,128], index: 7, kind: input, shape index: {}]
  %s8 = inlined_call_operand.vmem [shape: f32[1,128], index: 8, kind: input, shape index: {}]
  %s9 = inlined_call_operand.hbm [shape: f32[16,128], index: 9, kind: output, shape index: {}]
  %s10 = sld [smem:[#allocation0]]
  $region93: #{path_gru_forward.1} parent=0
    _
  %s12 = ssub.s32 1, %s10
  %s13 = scalar_select 0, %s12, %s10
  $region1: #{path_gru_forward.1} parent=0
    #allocation2 [shape = 'u8[8192]{0}', space=vmem, size = 0x2000, scoped, tag = 'input window, operand 0']
    #allocation3 [shape = 's32[2]{0}', space=sflag, size = 0x8, scoped, tag = 'scoped memory for path_gru_forward.1']
    #allocation4 [shape = 's32[2]{0}', space=sflag, size = 0x8, scoped, tag = 'scoped memory for path_gru_forward.1']
    #allocation5 [shape = 'u8[8192]{0}', space=vmem, size = 0x2000, scoped, tag = 'input window, operand 1']
    #allocation6 [shape = 's32[2]{0}', space=sflag, size = 0x8, scoped, tag = 'scoped memory for path_gru_forward.1']
    #allocation7 [shape = 'u8[65536]{0}', space=vmem, size = 0x10000, scoped, tag = 'input window, operand 2, single buffered']
    #allocation8 [shape = 'u8[131072]{0}', space=vmem, size = 0x20000, scoped, tag = 'input window, operand 4, single buffered']
    #allocation9 [shape = 's32[1]{0}', space=sflag, size = 0x4, scoped, tag = 'scoped memory for path_gru_forward.1']
    #allocation10 [shape = 'u8[65536]{0}', space=vmem, size = 0x10000, scoped, tag = 'input window, operand 6, single buffered']
    #allocation11 [shape = 'u8[65536]{0}', space=vmem, size = 0x10000, scoped, tag = 'input window, operand 7, single buffered']
    #allocation12 [shape = 's32[1]{0}', space=sflag, size = 0x4, scoped, tag = 'scoped memory for path_gru_forward.1']
    #allocation13 [shape = 'u8[8192]{0}', space=vmem, size = 0x2000, scoped, tag = 'output window, operand 0']
    %14 = vsyncpa [#allocation3], 0
    %s15 = scalar_lea.sflag [#allocation3], 1
    %16 = vsyncpa %s15, 0
    %17 = vsyncpa [#allocation6], 0
    %s18 = scalar_lea.sflag [#allocation6], 1
    %19 = vsyncpa %s18, 0
    %20 = vsyncpa [#allocation9], 0
    %21 = vsyncpa [#allocation12], 0
    %22 = vsyncpa [#allocation4], 0
    %s23 = scalar_lea.sflag [#allocation4], 1
    %24 = vsyncpa %s23, 0
    loop: start=0, step=1, limit=4
    $region2: #{path_gru_forward.1} parent=1 // loop_pre_header
      _
    $region3: #{path_gru_forward.1} parent=1 // loop_header
      %s26 = sphi 0, %s30
      %p27 = scmp.ge.s32.totalorder %s26, 4
      %s36 = sphi 0, %s38
      %s39 = sphi 0, %s36
      %s40 = sphi 0, %s39
      %s56 = sphi 0, %s40
      %s62 = sphi 0, %s64
      %s65 = sphi 0, %s62
      %s66 = sphi 0, %s65
      %s82 = sphi 0, %s66
      %s86 = sphi 0, %s86
      %s88 = sphi 0, %s86
      %s89 = sphi 0, %s88
      %s103 = sphi 0, %s89
      %s107 = sphi 0, %s107
      %s109 = sphi 0, %s107
      %s110 = sphi 0, %s109
      %s124 = sphi 0, %s110
      %s128 = sphi 0, %s128
      %s130 = sphi 0, %s128
      %s131 = sphi 0, %s130
      %s145 = sphi 0, %s131
      %s149 = sphi 0, %s149
      %s151 = sphi 0, %s149
      %s152 = sphi 0, %s151
      %s166 = sphi 0, %s152
      %s170 = sphi 0, %s170
      %s172 = sphi 0, %s170
      %s173 = sphi 0, %s172
      %s187 = sphi 0, %s173
      %s191 = sphi 0, %s191
      %s193 = sphi 0, %s191
      %s194 = sphi 0, %s193
      %s208 = sphi 0, %s194
      %s212 = sphi 0, %s212
      %s214 = sphi 0, %s212
      %s215 = sphi 0, %s214
      %s229 = sphi 0, %s215
      %s235 = sphi 0, %s237
      %s238 = sphi 0, %s235
      %s239 = sphi 0, %s238
      %s255 = sphi 0, %s239
    $region4: #{path_gru_forward.1} parent=1 // loop_header_branch
      %29 = sbr.rel (%p27) target = $region8
    $region5: #{path_gru_forward.1} parent=1 // loop_body
      %s31 = ssub.s32 %s26, 1
      %s32 = ssub.s32 %s26, 2
      %s33 = sadd.s32 %s26, 1
      %s34 = ssub.s32 %s26, %s33
      %p35 = scmp.eq.s32.totalorder %s34, 0
      %s37 = sadd.s32 %s36, 1
      %s38 = scalar_select %p35, %s36, %s37
      %p41 = pneg %p35
      %p42 = scmp.eq.s32.totalorder %s26, 1
      %p43 = por %p41, %p42
      %p44 = scmp.ne.s32.totalorder %s36, %s39
      %p45 = scmp.eq.s32.totalorder %s26, 0
      %p46 = por %p44, %p45
      %p47 = scmp.ne.s32.totalorder %s36, %s39
      %p48 = scmp.eq.s32.totalorder %s31, 1
      %p49 = por %p47, %p48
      %p50 = scmp.ne.s32.totalorder %s39, %s40
      %p51 = scmp.eq.s32.totalorder %s31, 0
      %p52 = por %p50, %p51
      %p53 = scmp.ne.s32.totalorder %s39, %s40
      %p54 = scmp.eq.s32.totalorder %s32, 1
      %p55 = por %p53, %p54
      %p57 = scmp.ne.s32.totalorder %s40, %s56
      %p58 = scmp.eq.s32.totalorder %s32, 0
      %p59 = por %p57, %p58
      %s60 = ssub.s32 %s26, %s33
      %p61 = scmp.eq.s32.totalorder %s60, 0
      %s63 = sadd.s32 %s62, 1
      %s64 = scalar_select %p61, %s62, %s63
      %p67 = pneg %p61
      %p68 = scmp.eq.s32.totalorder %s26, 1
      %p69 = por %p67, %p68
      %p70 = scmp.ne.s32.totalorder %s62, %s65
      %p71 = scmp.eq.s32.totalorder %s26, 0
      %p72 = por %p70, %p71
      %p73 = scmp.ne.s32.totalorder %s62, %s65
      %p74 = scmp.eq.s32.totalorder %s31, 1
      %p75 = por %p73, %p74
      %p76 = scmp.ne.s32.totalorder %s65, %s66
      %p77 = scmp.eq.s32.totalorder %s31, 0
      %p78 = por %p76, %p77
      %p79 = scmp.ne.s32.totalorder %s65, %s66
      %p80 = scmp.eq.s32.totalorder %s32, 1
      %p81 = por %p79, %p80
      %p83 = scmp.ne.s32.totalorder %s66, %s82
      %p84 = scmp.eq.s32.totalorder %s32, 0
      %p85 = por %p83, %p84
      %s87 = sadd.s32 %s86, 1
      %p90 = scmp.eq.s32.totalorder %s26, 1
      %p91 = scmp.ne.s32.totalorder %s86, %s88
      %p92 = scmp.eq.s32.totalorder %s26, 0
      %p93 = por %p91, %p92
      %p94 = scmp.ne.s32.totalorder %s86, %s88
      %p95 = scmp.eq.s32.totalorder %s31, 1
      %p96 = por %p94, %p95
      %p97 = scmp.ne.s32.totalorder %s88, %s89
      %p98 = scmp.eq.s32.totalorder %s31, 0
      %p99 = por %p97, %p98
      %p100 = scmp.ne.s32.totalorder %s88, %s89
      %p101 = scmp.eq.s32.totalorder %s32, 1
      %p102 = por %p100, %p101
      %p104 = scmp.ne.s32.totalorder %s89, %s103
      %p105 = scmp.eq.s32.totalorder %s32, 0
      %p106 = por %p104, %p105
      %s108 = sadd.s32 %s107, 1
      %p111 = scmp.eq.s32.totalorder %s26, 1
      %p112 = scmp.ne.s32.totalorder %s107, %s109
      %p113 = scmp.eq.s32.totalorder %s26, 0
      %p114 = por %p112, %p113
      %p115 = scmp.ne.s32.totalorder %s107, %s109
      %p116 = scmp.eq.s32.totalorder %s31, 1
      %p117 = por %p115, %p116
      %p118 = scmp.ne.s32.totalorder %s109, %s110
      %p119 = scmp.eq.s32.totalorder %s31, 0
      %p120 = por %p118, %p119
      %p121 = scmp.ne.s32.totalorder %s109, %s110
      %p122 = scmp.eq.s32.totalorder %s32, 1
      %p123 = por %p121, %p122
      %p125 = scmp.ne.s32.totalorder %s110, %s124
      %p126 = scmp.eq.s32.totalorder %s32, 0
      %p127 = por %p125, %p126
      %s129 = sadd.s32 %s128, 1
      %p132 = scmp.eq.s32.totalorder %s26, 1
      %p133 = scmp.ne.s32.totalorder %s128, %s130
      %p134 = scmp.eq.s32.totalorder %s26, 0
      %p135 = por %p133, %p134
      %p136 = scmp.ne.s32.totalorder %s128, %s130
      %p137 = scmp.eq.s32.totalorder %s31, 1
      %p138 = por %p136, %p137
      %p139 = scmp.ne.s32.totalorder %s130, %s131
      %p140 = scmp.eq.s32.totalorder %s31, 0
      %p141 = por %p139, %p140
      %p142 = scmp.ne.s32.totalorder %s130, %s131
      %p143 = scmp.eq.s32.totalorder %s32, 1
      %p144 = por %p142, %p143
      %p146 = scmp.ne.s32.totalorder %s131, %s145
      %p147 = scmp.eq.s32.totalorder %s32, 0
      %p148 = por %p146, %p147
      %s150 = sadd.s32 %s149, 1
      %p153 = scmp.eq.s32.totalorder %s26, 1
      %p154 = scmp.ne.s32.totalorder %s149, %s151
      %p155 = scmp.eq.s32.totalorder %s26, 0
      %p156 = por %p154, %p155
      %p157 = scmp.ne.s32.totalorder %s149, %s151
      %p158 = scmp.eq.s32.totalorder %s31, 1
      %p159 = por %p157, %p158
      %p160 = scmp.ne.s32.totalorder %s151, %s152
      %p161 = scmp.eq.s32.totalorder %s31, 0
      %p162 = por %p160, %p161
      %p163 = scmp.ne.s32.totalorder %s151, %s152
      %p164 = scmp.eq.s32.totalorder %s32, 1
      %p165 = por %p163, %p164
      %p167 = scmp.ne.s32.totalorder %s152, %s166
      %p168 = scmp.eq.s32.totalorder %s32, 0
      %p169 = por %p167, %p168
      %s171 = sadd.s32 %s170, 1
      %p174 = scmp.eq.s32.totalorder %s26, 1
      %p175 = scmp.ne.s32.totalorder %s170, %s172
      %p176 = scmp.eq.s32.totalorder %s26, 0
      %p177 = por %p175, %p176
      %p178 = scmp.ne.s32.totalorder %s170, %s172
      %p179 = scmp.eq.s32.totalorder %s31, 1
      %p180 = por %p178, %p179
      %p181 = scmp.ne.s32.totalorder %s172, %s173
      %p182 = scmp.eq.s32.totalorder %s31, 0
      %p183 = por %p181, %p182
      %p184 = scmp.ne.s32.totalorder %s172, %s173
      %p185 = scmp.eq.s32.totalorder %s32, 1
      %p186 = por %p184, %p185
      %p188 = scmp.ne.s32.totalorder %s173, %s187
      %p189 = scmp.eq.s32.totalorder %s32, 0
      %p190 = por %p188, %p189
      %s192 = sadd.s32 %s191, 1
      %p195 = scmp.eq.s32.totalorder %s26, 1
      %p196 = scmp.ne.s32.totalorder %s191, %s193
      %p197 = scmp.eq.s32.totalorder %s26, 0
      %p198 = por %p196, %p197
      %p199 = scmp.ne.s32.totalorder %s191, %s193
      %p200 = scmp.eq.s32.totalorder %s31, 1
      %p201 = por %p199, %p200
      %p202 = scmp.ne.s32.totalorder %s193, %s194
      %p203 = scmp.eq.s32.totalorder %s31, 0
      %p204 = por %p202, %p203
      %p205 = scmp.ne.s32.totalorder %s193, %s194
      %p206 = scmp.eq.s32.totalorder %s32, 1
      %p207 = por %p205, %p206
      %p209 = scmp.ne.s32.totalorder %s194, %s208
      %p210 = scmp.eq.s32.totalorder %s32, 0
      %p211 = por %p209, %p210
      %s213 = sadd.s32 %s212, 1
      %p216 = scmp.eq.s32.totalorder %s26, 1
      %p217 = scmp.ne.s32.totalorder %s212, %s214
      %p218 = scmp.eq.s32.totalorder %s26, 0
      %p219 = por %p217, %p218
      %p220 = scmp.ne.s32.totalorder %s212, %s214
      %p221 = scmp.eq.s32.totalorder %s31, 1
      %p222 = por %p220, %p221
      %p223 = scmp.ne.s32.totalorder %s214, %s215
      %p224 = scmp.eq.s32.totalorder %s31, 0
      %p225 = por %p223, %p224
      %p226 = scmp.ne.s32.totalorder %s214, %s215
      %p227 = scmp.eq.s32.totalorder %s32, 1
      %p228 = por %p226, %p227
      %p230 = scmp.ne.s32.totalorder %s215, %s229
      %p231 = scmp.eq.s32.totalorder %s32, 0
      %p232 = por %p230, %p231
      %s233 = ssub.s32 %s26, %s33
      %p234 = scmp.eq.s32.totalorder %s233, 0
      %s236 = sadd.s32 %s235, 1
      %s237 = scalar_select %p234, %s235, %s236
      %p240 = pneg %p234
      %p241 = scmp.eq.s32.totalorder %s26, 1
      %p242 = por %p240, %p241
      %p243 = scmp.ne.s32.totalorder %s235, %s238
      %p244 = scmp.eq.s32.totalorder %s26, 0
      %p245 = por %p243, %p244
      %p246 = scmp.ne.s32.totalorder %s235, %s238
      %p247 = scmp.eq.s32.totalorder %s31, 1
      %p248 = por %p246, %p247
      %p249 = scmp.ne.s32.totalorder %s238, %s239
      %p250 = scmp.eq.s32.totalorder %s31, 0
      %p251 = por %p249, %p250
      %p252 = scmp.ne.s32.totalorder %s238, %s239
      %p253 = scmp.eq.s32.totalorder %s32, 1
      %p254 = por %p252, %p253
      %p256 = scmp.ne.s32.totalorder %s239, %s255
      %p257 = scmp.eq.s32.totalorder %s32, 0
      %p258 = por %p256, %p257
      %p259 = scmp.le.s32.totalorder 1, %s26
      %p260 = scmp.lt.s32.totalorder %s26, 3
      %p261 = pnand %p259, %p260
      %p262 = pneg %p261
      // Predicated region
      $region9: #{path_gru_forward.1} parent=5 // pred_check
        _
      $region10: #{path_gru_forward.1} parent=5 // pred_check_branch
        %264 = sbr.rel (%p261) target = $region12
      $region11: #{path_gru_forward.1} parent=5 // pred_region
        %s265 = ssub.s32 %s26, 1
        // Predicated region
        $region13: #{path_gru_forward.1} parent=11 // pred_check
          %p266 = pneg %p99
        $region14: #{path_gru_forward.1} parent=11 // pred_check_branch
          %268 = sbr.rel (%p266) target = $region16
        $region15: #{path_gru_forward.1} parent=11 // pred_region
          %s270 = ssub.s32 2048, 2048
          %271 = vsyncadd [#allocation6], %s270
          %s272 = sshll.u32 [#allocation7], 4
          %s273 = int_to_ptr.vmem [resolvable:$true] %s272
          %278 = dma.hbm_to_vmem [thread:$0]  %s2, 2048, %s273, [#allocation6], 128, 128, 8
        $region16: #{path_gru_forward.1} parent=11 // pred_fallthru
          _
        // Predicated region
        $region17: #{path_gru_forward.1} parent=11 // pred_check
          %p279 = pneg %p120
        $region18: #{path_gru_forward.1} parent=11 // pred_check_branch
          %281 = sbr.rel (%p279) target = $region20
        $region19: #{path_gru_forward.1} parent=11 // pred_region
          _
        $region20: #{path_gru_forward.1} parent=11 // pred_fallthru
          _
        // Predicated region
        $region21: #{path_gru_forward.1} parent=11 // pred_check
          %p282 = pneg %p141
        $region22: #{path_gru_forward.1} parent=11 // pred_check_branch
          %284 = sbr.rel (%p282) target = $region24
        $region23: #{path_gru_forward.1} parent=11 // pred_region
          %s286 = ssub.s32 4096, 4096
          %287 = vsyncadd [#allocation9], %s286
          %s288 = sshll.u32 [#allocation8], 4
          %s289 = int_to_ptr.vmem [resolvable:$true] %s288
          %294 = dma.hbm_to_vmem [thread:$0]  %s4, 4096, %s289, [#allocation9], 256, 256, 16
        $region24: #{path_gru_forward.1} parent=11 // pred_fallthru
          _
        // Predicated region
        $region25: #{path_gru_forward.1} parent=11 // pred_check
          %p295 = pneg %p162
        $region26: #{path_gru_forward.1} parent=11 // pred_check_branch
          %297 = sbr.rel (%p295) target = $region28
        $region27: #{path_gru_forward.1} parent=11 // pred_region
          _
        $region28: #{path_gru_forward.1} parent=11 // pred_fallthru
          _
        // Predicated region
        $region29: #{path_gru_forward.1} parent=11 // pred_check
          %p298 = pneg %p183
        $region30: #{path_gru_forward.1} parent=11 // pred_check_branch
          %300 = sbr.rel (%p298) target = $region32
        $region31: #{path_gru_forward.1} parent=11 // pred_region
          %s302 = ssub.s32 2048, 2048
          %303 = vsyncadd [#allocation9], %s302
          %s304 = sshll.u32 [#allocation10], 4
          %s305 = int_to_ptr.vmem [resolvable:$true] %s304
          %310 = dma.hbm_to_vmem [thread:$0]  %s6, 2048, %s305, [#allocation9], 128, 128, 8
        $region32: #{path_gru_forward.1} parent=11 // pred_fallthru
          _
        // Predicated region
        $region33: #{path_gru_forward.1} parent=11 // pred_check
          %p311 = pneg %p204
        $region34: #{path_gru_forward.1} parent=11 // pred_check_branch
          %313 = sbr.rel (%p311) target = $region36
        $region35: #{path_gru_forward.1} parent=11 // pred_region
          %s315 = ssub.s32 2048, 2048
          %316 = vsyncadd [#allocation12], %s315
          %s317 = sshll.u32 [#allocation11], 4
          %s318 = int_to_ptr.vmem [resolvable:$true] %s317
          %323 = dma.hbm_to_vmem [thread:$0]  %s7, 2048, %s318, [#allocation12], 128, 128, 8
        $region36: #{path_gru_forward.1} parent=11 // pred_fallthru
          _
        // Predicated region
        $region37: #{path_gru_forward.1} parent=11 // pred_check
          %p324 = pneg %p225
        $region38: #{path_gru_forward.1} parent=11 // pred_check_branch
          %326 = sbr.rel (%p324) target = $region40
        $region39: #{path_gru_forward.1} parent=11 // pred_region
          _
        $region40: #{path_gru_forward.1} parent=11 // pred_fallthru
          _
      $region12: #{path_gru_forward.1} parent=5 // pred_fallthru
        _
      %p327 = scmp.lt.s32.totalorder %s26, 2
      // Predicated region
      $region41: #{path_gru_forward.1} parent=5 // pred_check
        %p328 = pneg %p327
      $region42: #{path_gru_forward.1} parent=5 // pred_check_branch
        %330 = sbr.rel (%p328) target = $region44
      $region43: #{path_gru_forward.1} parent=5 // pred_region
        // Predicated region
        $region45: #{path_gru_forward.1} parent=43 // pred_check
          %p331 = pneg %p46
        $region46: #{path_gru_forward.1} parent=43 // pred_check_branch
          %333 = sbr.rel (%p331) target = $region48
        $region47: #{path_gru_forward.1} parent=43 // pred_region
          %s334 = sand.u32 %s36, 1
          %s335 = scalar_lea.sflag [#allocation3], %s334
          %s336 = sand.u32 %s36, 1
          %s337 = smul.addr %s336, 8
          %s338 = scalar_lea.vmem [#allocation2], %s337
          %s340 = ssub.s32 128, 128
          %341 = vsyncadd %s335, %s340
          %s342 = smul.addr %s26, 128
          %s343 = scalar_lea.hbm %s0, %s342
          %s345 = sshll.u32 %s338, 4
          %s346 = int_to_ptr.vmem [resolvable:$true] %s345
          %348 = dma.hbm_to_vmem [thread:$0]  %s343, 128, %s346, %s335
        $region48: #{path_gru_forward.1} parent=43 // pred_fallthru
          _
        // Predicated region
        $region49: #{path_gru_forward.1} parent=43 // pred_check
          %p349 = pneg %p72
        $region50: #{path_gru_forward.1} parent=43 // pred_check_branch
          %351 = sbr.rel (%p349) target = $region52
        $region51: #{path_gru_forward.1} parent=43 // pred_region
          %s352 = sand.u32 %s26, 1
          %s353 = scalar_lea.sflag [#allocation6], %s352
          %s354 = sand.u32 %s62, 1
          %s355 = smul.addr %s354, 8
          %s356 = scalar_lea.vmem [#allocation5], %s355
          %s358 = ssub.s32 128, 128
          %359 = vsyncadd %s353, %s358
          %s360 = smul.addr %s26, 128
          %s361 = scalar_lea.hbm %s1, %s360
          %s363 = sshll.u32 %s356, 4
          %s364 = int_to_ptr.vmem [resolvable:$true] %s363
          %366 = dma.hbm_to_vmem [thread:$0]  %s361, 128, %s364, %s353
        $region52: #{path_gru_forward.1} parent=43 // pred_fallthru
          _
      $region44: #{path_gru_forward.1} parent=5 // pred_fallthru
        _
      %p367 = scmp.le.s32.totalorder 1, %s26
      %p368 = scmp.lt.s32.totalorder %s26, 3
      %p369 = pnand %p367, %p368
      %p370 = pneg %p369
      // Predicated region
      $region53: #{path_gru_forward.1} parent=5 // pred_check
        _
      $region54: #{path_gru_forward.1} parent=5 // pred_check_branch
        %372 = sbr.rel (%p369) target = $region56
      $region55: #{path_gru_forward.1} parent=5 // pred_region
        %s373 = ssub.s32 %s26, 1
        %s374 = sand.u32 %s39, 1
        %s375 = scalar_lea.sflag [#allocation3], %s374
        %s376 = sand.u32 %s39, 1
        %s377 = smul.addr %s376, 8
        %s378 = scalar_lea.vmem [#allocation2], %s377
        // Predicated region
        $region57: #{path_gru_forward.1} parent=55 // pred_check
          %p379 = pneg %p52
        $region58: #{path_gru_forward.1} parent=55 // pred_check_branch
          %381 = sbr.rel (%p379) target = $region60
        $region59: #{path_gru_forward.1} parent=55 // pred_region
          %382 = dma.done %s375, 128
        $region60: #{path_gru_forward.1} parent=55 // pred_fallthru
          _
        %s383 = sand.u32 %s31, 1
        %s384 = scalar_lea.sflag [#allocation6], %s383
        %s385 = sand.u32 %s65, 1
        %s386 = smul.addr %s385, 8
        %s387 = scalar_lea.vmem [#allocation5], %s386
        // Predicated region
        $region61: #{path_gru_forward.1} parent=55 // pred_check
          %p388 = pneg %p78
        $region62: #{path_gru_forward.1} parent=55 // pred_check_branch
          %390 = sbr.rel (%p388) target = $region64
        $region63: #{path_gru_forward.1} parent=55 // pred_region
          %391 = dma.done %s384, 128
        $region64: #{path_gru_forward.1} parent=55 // pred_fallthru
          _
        // Predicated region
        $region65: #{path_gru_forward.1} parent=55 // pred_check
          %p392 = pneg %p99
        $region66: #{path_gru_forward.1} parent=55 // pred_check_branch
          %394 = sbr.rel (%p392) target = $region68
        $region67: #{path_gru_forward.1} parent=55 // pred_region
          %395 = dma.done [#allocation6], 2048
        $region68: #{path_gru_forward.1} parent=55 // pred_fallthru
          _
        // Predicated region
        $region69: #{path_gru_forward.1} parent=55 // pred_check
          %p396 = pneg %p141
        $region70: #{path_gru_forward.1} parent=55 // pred_check_branch
          %398 = sbr.rel (%p396) target = $region72
        $region71: #{path_gru_forward.1} parent=55 // pred_region
          %399 = dma.done [#allocation9], 4096
        $region72: #{path_gru_forward.1} parent=55 // pred_fallthru
          _
        // Predicated region
        $region73: #{path_gru_forward.1} parent=55 // pred_check
          %p400 = pneg %p183
        $region74: #{path_gru_forward.1} parent=55 // pred_check_branch
          %402 = sbr.rel (%p400) target = $region76
        $region75: #{path_gru_forward.1} parent=55 // pred_region
          %403 = dma.done [#allocation9], 2048
        $region76: #{path_gru_forward.1} parent=55 // pred_fallthru
          _
        // Predicated region
        $region77: #{path_gru_forward.1} parent=55 // pred_check
          %p404 = pneg %p204
        $region78: #{path_gru_forward.1} parent=55 // pred_check_branch
          %406 = sbr.rel (%p404) target = $region80
        $region79: #{path_gru_forward.1} parent=55 // pred_region
          %407 = dma.done [#allocation12], 2048
        $region80: #{path_gru_forward.1} parent=55 // pred_fallthru
          _
        %s408 = sand.u32 %s39, 1
        %s409 = scalar_lea.sflag [#allocation3], %s408
        %s410 = sand.u32 %s39, 1
        %s411 = smul.addr %s410, 8
        %s412 = scalar_lea.vmem [#allocation2], %s411
        %p413 = pneg %p52
        %p414 = pneg %p49
        %s415 = sand.u32 %s31, 1
        %s416 = scalar_lea.sflag [#allocation6], %s415
        %s417 = sand.u32 %s65, 1
        %s418 = smul.addr %s417, 8
        %s419 = scalar_lea.vmem [#allocation5], %s418
        %p420 = pneg %p78
        %p421 = pneg %p75
        %p422 = pneg %p99
        %p423 = pneg %p96
        %p424 = pneg %p120
        %p425 = pneg %p117
        %p426 = pneg %p141
        %p427 = pneg %p138
        %p428 = pneg %p162
        %p429 = pneg %p159
        %p430 = pneg %p183
        %p431 = pneg %p180
        %p432 = pneg %p204
        %p433 = pneg %p201
        %p434 = pneg %p225
        %p435 = pneg %p222
        %p436 = pneg %p251
        %p437 = pneg %p248
        %s438 = sand.u32 %s238, 1
        %s439 = scalar_lea.sflag [#allocation4], %s438
        %s440 = sand.u32 %s238, 1
        %s441 = smul.addr %s440, 8
        %s442 = scalar_lea.vmem [#allocation13], %s441
        %v443 = vld [vmem:[%s378] sm:$0xff]
        %v444 = vld [vmem:[%s387] sm:$0xff]
        %v445 = vld [vmem:[#allocation10] sm:$0xff]
        %v446 = vld [vmem:[#allocation10 + $0x8] sm:$0xff]
        %v447 = vld [vmem:[#allocation10 + $0x10] sm:$0xff]
        %v448 = vld [vmem:[#allocation10 + $0x18] sm:$0xff]
        %v449 = vld [vmem:[#allocation10 + $0x20] sm:$0xff]
        %v450 = vld [vmem:[#allocation10 + $0x28] sm:$0xff]
        %v451 = vld [vmem:[#allocation10 + $0x30] sm:$0xff]
        %v452 = vld [vmem:[#allocation10 + $0x38] sm:$0xff]
        %v453 = vld [vmem:[#allocation10 + $0x40] sm:$0xff]
        %v454 = vld [vmem:[#allocation10 + $0x48] sm:$0xff]
        %v455 = vld [vmem:[#allocation10 + $0x50] sm:$0xff]
        %v456 = vld [vmem:[#allocation10 + $0x58] sm:$0xff]
        %v457 = vld [vmem:[#allocation10 + $0x60] sm:$0xff]
        %v458 = vld [vmem:[#allocation10 + $0x68] sm:$0xff]
        %v459 = vld [vmem:[#allocation10 + $0x70] sm:$0xff]
        %v460 = vld [vmem:[#allocation10 + $0x78] sm:$0xff]
        %461 = vmatprep.subr.mxu0 0.0
        %462 = vmatpush1.msra.mxu0 %v460
        %463 = vmatprep.subr.mxu0 0.0
        %464 = vmatpush1.msra.mxu0 %v459
        %465 = vmatprep.subr.mxu0 0.0
        %466 = vmatpush1.msra.mxu0 %v458
        %467 = vmatprep.subr.mxu0 0.0
        %468 = vmatpush1.msra.mxu0 %v457
        %469 = vmatprep.subr.mxu0 0.0
        %470 = vmatpush1.msra.mxu0 %v456
        %471 = vmatprep.subr.mxu0 0.0
        %472 = vmatpush1.msra.mxu0 %v455
        %473 = vmatprep.subr.mxu0 0.0
        %474 = vmatpush1.msra.mxu0 %v454
        %475 = vmatprep.subr.mxu0 0.0
        %476 = vmatpush1.msra.mxu0 %v453
        %477 = vmatprep.subr.mxu0 0.0
        %478 = vmatpush1.msra.mxu0 %v452
        %479 = vmatprep.subr.mxu0 0.0
        %480 = vmatpush1.msra.mxu0 %v451
        %481 = vmatprep.subr.mxu0 0.0
        %482 = vmatpush1.msra.mxu0 %v450
        %483 = vmatprep.subr.mxu0 0.0
        %484 = vmatpush1.msra.mxu0 %v449
        %485 = vmatprep.subr.mxu0 0.0
        %486 = vmatpush1.msra.mxu0 %v448
        %487 = vmatprep.subr.mxu0 0.0
        %488 = vmatpush1.msra.mxu0 %v447
        %489 = vmatprep.subr.mxu0 0.0
        %490 = vmatpush1.msra.mxu0 %v446
        %491 = vmatprep.subr.mxu0 0.0
        %492 = vmatpush1.msra.mxu0 %v445
        %493 = vmatprep.subr.mxu0 0.0
        %494 = vmatpush2.msra.mxu0 0.0
        %495 = vmatprep.subr.mxu0 0.0
        %496 = vmatpush2.msra.mxu0 0.0
        %497 = vmatprep.subr.mxu0 0.0
        %498 = vmatpush2.msra.mxu0 0.0
        %499 = vmatprep.subr.mxu0 0.0
        %500 = vmatpush2.msra.mxu0 0.0
        %501 = vmatprep.subr.mxu0 0.0
        %502 = vmatpush2.msra.mxu0 0.0
        %503 = vmatprep.subr.mxu0 0.0
        %504 = vmatpush2.msra.mxu0 0.0
        %505 = vmatprep.subr.mxu0 0.0
        %506 = vmatpush2.msra.mxu0 0.0
        %507 = vmatprep.subr.mxu0 0.0
        %508 = vmatpush2.msra.mxu0 0.0
        %509 = vmatprep.subr.mxu0 0.0
        %510 = vmatpush2.msra.mxu0 0.0
        %511 = vmatprep.subr.mxu0 0.0
        %512 = vmatpush2.msra.mxu0 0.0
        %513 = vmatprep.subr.mxu0 0.0
        %514 = vmatpush2.msra.mxu0 0.0
        %515 = vmatprep.subr.mxu0 0.0
        %516 = vmatpush2.msra.mxu0 0.0
        %517 = vmatprep.subr.mxu0 0.0
        %518 = vmatpush2.msra.mxu0 0.0
        %519 = vmatprep.subr.mxu0 0.0
        %520 = vmatpush2.msra.mxu0 0.0
        %521 = vmatprep.subr.mxu0 0.0
        %522 = vmatpush2.msra.mxu0 0.0
        %523 = vmatprep.subr.mxu0 0.0
        %524 = vmatpush2.msra.mxu0 0.0
        %525 = vmatprep.mubr.f32.mxu0 0.0
        %526 = vmatmul.mubr.f32.gmra.mxu0 %v444
        %v527 = vpop.f32.mrf.mxu0
        %v528 = vadd.f32 0.0, %v527
        %v529 = vpop.f32.mrf.mxu0
        %530 = vdwg.mxu0
        %v531 = vld [vmem:[#allocation11] sm:$0xff]
        %v532 = vld [vmem:[#allocation11 + $0x8] sm:$0xff]
        %v533 = vld [vmem:[#allocation11 + $0x10] sm:$0xff]
        %v534 = vld [vmem:[#allocation11 + $0x18] sm:$0xff]
        %v535 = vld [vmem:[#allocation11 + $0x20] sm:$0xff]
        %v536 = vld [vmem:[#allocation11 + $0x28] sm:$0xff]
        %v537 = vld [vmem:[#allocation11 + $0x30] sm:$0xff]
        %v538 = vld [vmem:[#allocation11 + $0x38] sm:$0xff]
        %v539 = vld [vmem:[#allocation11 + $0x40] sm:$0xff]
        %v540 = vld [vmem:[#allocation11 + $0x48] sm:$0xff]
        %v541 = vld [vmem:[#allocation11 + $0x50] sm:$0xff]
        %v542 = vld [vmem:[#allocation11 + $0x58] sm:$0xff]
        %v543 = vld [vmem:[#allocation11 + $0x60] sm:$0xff]
        %v544 = vld [vmem:[#allocation11 + $0x68] sm:$0xff]
        %v545 = vld [vmem:[#allocation11 + $0x70] sm:$0xff]
        %v546 = vld [vmem:[#allocation11 + $0x78] sm:$0xff]
        %v547 = vsub.f32 %v443, %v444
        %v548 = vld [vmem:[#allocation7] sm:$0xff]
        %v549 = vld [vmem:[#allocation7 + $0x8] sm:$0xff]
        %v550 = vld [vmem:[#allocation7 + $0x10] sm:$0xff]
        %v551 = vld [vmem:[#allocation7 + $0x18] sm:$0xff]
        %v552 = vld [vmem:[#allocation7 + $0x20] sm:$0xff]
        %v553 = vld [vmem:[#allocation7 + $0x28] sm:$0xff]
        %v554 = vld [vmem:[#allocation7 + $0x30] sm:$0xff]
        %v555 = vld [vmem:[#allocation7 + $0x38] sm:$0xff]
        %v556 = vld [vmem:[#allocation7 + $0x40] sm:$0xff]
        %v557 = vld [vmem:[#allocation7 + $0x48] sm:$0xff]
        %v558 = vld [vmem:[#allocation7 + $0x50] sm:$0xff]
        %v559 = vld [vmem:[#allocation7 + $0x58] sm:$0xff]
        %v560 = vld [vmem:[#allocation7 + $0x60] sm:$0xff]
        %v561 = vld [vmem:[#allocation7 + $0x68] sm:$0xff]
        %v562 = vld [vmem:[#allocation7 + $0x70] sm:$0xff]
        %v563 = vld [vmem:[#allocation7 + $0x78] sm:$0xff]
        %v564 = vld [vmem:[%s3] sm:$0x1]
        %v566 = vlaneseq
        %v567 = vshrl.u32 %v566, 7
        %v568 = vsub.s32 0, %v567
        %v569 = vrot.slane %v564, %v568
        %571 = vmatprep.subr.mxu0 0.0
        %572 = vmatpush1.msra.mxu0 %v563
        %573 = vmatprep.subr.mxu0 0.0
        %574 = vmatpush1.msra.mxu0 %v562
        %575 = vmatprep.subr.mxu0 0.0
        %576 = vmatpush1.msra.mxu0 %v561
        %577 = vmatprep.subr.mxu0 0.0
        %578 = vmatpush1.msra.mxu0 %v560
        %579 = vmatprep.subr.mxu0 0.0
        %580 = vmatpush1.msra.mxu0 %v559
        %581 = vmatprep.subr.mxu0 0.0
        %582 = vmatpush1.msra.mxu0 %v558
        %583 = vmatprep.subr.mxu0 0.0
        %584 = vmatpush1.msra.mxu0 %v557
        %585 = vmatprep.subr.mxu0 0.0
        %586 = vmatpush1.msra.mxu0 %v556
        %587 = vmatprep.subr.mxu0 0.0
        %588 = vmatpush1.msra.mxu0 %v555
        %589 = vmatprep.subr.mxu0 0.0
        %590 = vmatpush1.msra.mxu0 %v554
        %591 = vmatprep.subr.mxu0 0.0
        %592 = vmatpush1.msra.mxu0 %v553
        %593 = vmatprep.subr.mxu0 0.0
        %594 = vmatpush1.msra.mxu0 %v552
        %595 = vmatprep.subr.mxu0 0.0
        %596 = vmatpush1.msra.mxu0 %v551
        %597 = vmatprep.subr.mxu0 0.0
        %598 = vmatpush1.msra.mxu0 %v550
        %599 = vmatprep.subr.mxu0 0.0
        %600 = vmatpush1.msra.mxu0 %v549
        %601 = vmatprep.subr.mxu0 0.0
        %602 = vmatpush1.msra.mxu0 %v548
        %603 = vmatprep.subr.mxu0 0.0
        %604 = vmatpush2.msra.mxu0 0.0
        %605 = vmatprep.subr.mxu0 0.0
        %606 = vmatpush2.msra.mxu0 0.0
        %607 = vmatprep.subr.mxu0 0.0
        %608 = vmatpush2.msra.mxu0 0.0
        %609 = vmatprep.subr.mxu0 0.0
        %610 = vmatpush2.msra.mxu0 0.0
        %611 = vmatprep.subr.mxu0 0.0
        %612 = vmatpush2.msra.mxu0 0.0
        %613 = vmatprep.subr.mxu0 0.0
        %614 = vmatpush2.msra.mxu0 0.0
        %615 = vmatprep.subr.mxu0 0.0
        %616 = vmatpush2.msra.mxu0 0.0
        %617 = vmatprep.subr.mxu0 0.0
        %618 = vmatpush2.msra.mxu0 0.0
        %619 = vmatprep.subr.mxu0 0.0
        %620 = vmatpush2.msra.mxu0 0.0
        %621 = vmatprep.subr.mxu0 0.0
        %622 = vmatpush2.msra.mxu0 0.0
        %623 = vmatprep.subr.mxu0 0.0
        %624 = vmatpush2.msra.mxu0 0.0
        %625 = vmatprep.subr.mxu0 0.0
        %626 = vmatpush2.msra.mxu0 0.0
        %627 = vmatprep.subr.mxu0 0.0
        %628 = vmatpush2.msra.mxu0 0.0
        %629 = vmatprep.subr.mxu0 0.0
        %630 = vmatpush2.msra.mxu0 0.0
        %631 = vmatprep.subr.mxu0 0.0
        %632 = vmatpush2.msra.mxu0 0.0
        %633 = vmatprep.subr.mxu0 0.0
        %634 = vmatpush2.msra.mxu0 0.0
        %635 = vmatprep.mubr.f32.mxu0 0.0
        %636 = vmatmul.mubr.f32.gmra.mxu0 %v547
        %v637 = vpop.f32.mrf.mxu0
        %v638 = vadd.f32 %v569, %v637
        %v639 = vpop.f32.mrf.mxu0
        %640 = vdwg.mxu0
        %v641 = vmax.f32 %v638, 0.0
        %v642 = vld [vmem:[#allocation8] sm:$0xff]
        %v643 = vld [vmem:[#allocation8 + $0x8] sm:$0xff]
        %v644 = vld [vmem:[#allocation8 + $0x10] sm:$0xff]
        %v645 = vld [vmem:[#allocation8 + $0x18] sm:$0xff]
        %v646 = vld [vmem:[#allocation8 + $0x20] sm:$0xff]
        %v647 = vld [vmem:[#allocation8 + $0x28] sm:$0xff]
        %v648 = vld [vmem:[#allocation8 + $0x30] sm:$0xff]
        %v649 = vld [vmem:[#allocation8 + $0x38] sm:$0xff]
        %v650 = vld [vmem:[#allocation8 + $0x40] sm:$0xff]
        %v651 = vld [vmem:[#allocation8 + $0x48] sm:$0xff]
        %v652 = vld [vmem:[#allocation8 + $0x50] sm:$0xff]
        %v653 = vld [vmem:[#allocation8 + $0x58] sm:$0xff]
        %v654 = vld [vmem:[#allocation8 + $0x60] sm:$0xff]
        %v655 = vld [vmem:[#allocation8 + $0x68] sm:$0xff]
        %v656 = vld [vmem:[#allocation8 + $0x70] sm:$0xff]
        %v657 = vld [vmem:[#allocation8 + $0x78] sm:$0xff]
        %v658 = vld [vmem:[#allocation8 + $0x80] sm:$0xff]
        %v659 = vld [vmem:[#allocation8 + $0x88] sm:$0xff]
        %v660 = vld [vmem:[#allocation8 + $0x90] sm:$0xff]
        %v661 = vld [vmem:[#allocation8 + $0x98] sm:$0xff]
        %v662 = vld [vmem:[#allocation8 + $0xa0] sm:$0xff]
        %v663 = vld [vmem:[#allocation8 + $0xa8] sm:$0xff]
        %v664 = vld [vmem:[#allocation8 + $0xb0] sm:$0xff]
        %v665 = vld [vmem:[#allocation8 + $0xb8] sm:$0xff]
        %v666 = vld [vmem:[#allocation8 + $0xc0] sm:$0xff]
        %v667 = vld [vmem:[#allocation8 + $0xc8] sm:$0xff]
        %v668 = vld [vmem:[#allocation8 + $0xd0] sm:$0xff]
        %v669 = vld [vmem:[#allocation8 + $0xd8] sm:$0xff]
        %v670 = vld [vmem:[#allocation8 + $0xe0] sm:$0xff]
        %v671 = vld [vmem:[#allocation8 + $0xe8] sm:$0xff]
        %v672 = vld [vmem:[#allocation8 + $0xf0] sm:$0xff]
        %v673 = vld [vmem:[#allocation8 + $0xf8] sm:$0xff]
        %v674 = vld [vmem:[%s5] sm:$0x3]
        %v676 = vlaneseq
        %v677 = vshrl.u32 %v676, 7
        %v678 = vsub.s32 0, %v677
        %v679 = vrot.slane %v674, %v678
        %v680 = vlaneseq
        %v681 = vshrl.u32 %v680, 7
        %v682 = vsub.s32 1, %v681
        %v683 = vrot.slane %v674, %v682
        %686 = vmatprep.subr.mxu0 %v673
        %687 = vmatpush1.msra.mxu0 %v672
        %688 = vmatprep.subr.mxu0 %v671
        %689 = vmatpush1.msra.mxu0 %v670
        %690 = vmatprep.subr.mxu0 %v669
        %691 = vmatpush1.msra.mxu0 %v668
        %692 = vmatprep.subr.mxu0 %v667
        %693 = vmatpush1.msra.mxu0 %v666
        %694 = vmatprep.subr.mxu0 %v665
        %695 = vmatpush1.msra.mxu0 %v664
        %696 = vmatprep.subr.mxu0 %v663
        %697 = vmatpush1.msra.mxu0 %v662
        %698 = vmatprep.subr.mxu0 %v661
        %699 = vmatpush1.msra.mxu0 %v660
        %700 = vmatprep.subr.mxu0 %v659
        %701 = vmatpush1.msra.mxu0 %v658
        %702 = vmatprep.subr.mxu0 %v657
        %703 = vmatpush1.msra.mxu0 %v656
        %704 = vmatprep.subr.mxu0 %v655
        %705 = vmatpush1.msra.mxu0 %v654
        %706 = vmatprep.subr.mxu0 %v653
        %707 = vmatpush1.msra.mxu0 %v652
        %708 = vmatprep.subr.mxu0 %v651
        %709 = vmatpush1.msra.mxu0 %v650
        %710 = vmatprep.subr.mxu0 %v649
        %711 = vmatpush1.msra.mxu0 %v648
        %712 = vmatprep.subr.mxu0 %v647
        %713 = vmatpush1.msra.mxu0 %v646
        %714 = vmatprep.subr.mxu0 %v645
        %715 = vmatpush1.msra.mxu0 %v644
        %716 = vmatprep.subr.mxu0 %v643
        %717 = vmatpush1.msra.mxu0 %v642
        %718 = vmatprep.subr.mxu0 0.0
        %719 = vmatpush2.msra.mxu0 0.0
        %720 = vmatprep.subr.mxu0 0.0
        %721 = vmatpush2.msra.mxu0 0.0
        %722 = vmatprep.subr.mxu0 0.0
        %723 = vmatpush2.msra.mxu0 0.0
        %724 = vmatprep.subr.mxu0 0.0
        %725 = vmatpush2.msra.mxu0 0.0
        %726 = vmatprep.subr.mxu0 0.0
        %727 = vmatpush2.msra.mxu0 0.0
        %728 = vmatprep.subr.mxu0 0.0
        %729 = vmatpush2.msra.mxu0 0.0
        %730 = vmatprep.subr.mxu0 0.0
        %731 = vmatpush2.msra.mxu0 0.0
        %732 = vmatprep.subr.mxu0 0.0
        %733 = vmatpush2.msra.mxu0 0.0
        %734 = vmatprep.subr.mxu0 0.0
        %735 = vmatpush2.msra.mxu0 0.0
        %736 = vmatprep.subr.mxu0 0.0
        %737 = vmatpush2.msra.mxu0 0.0
        %738 = vmatprep.subr.mxu0 0.0
        %739 = vmatpush2.msra.mxu0 0.0
        %740 = vmatprep.subr.mxu0 0.0
        %741 = vmatpush2.msra.mxu0 0.0
        %742 = vmatprep.subr.mxu0 0.0
        %743 = vmatpush2.msra.mxu0 0.0
        %744 = vmatprep.subr.mxu0 0.0
        %745 = vmatpush2.msra.mxu0 0.0
        %746 = vmatprep.subr.mxu0 0.0
        %747 = vmatpush2.msra.mxu0 0.0
        %748 = vmatprep.subr.mxu0 0.0
        %749 = vmatpush2.msra.mxu0 0.0
        %750 = vmatprep.mubr.f32.mxu0 0.0
        %751 = vmatmul.mubr.f32.gmra.mxu0 %v641
        %v752 = vpop.f32.mrf.mxu0
        %v753 = vadd.f32 %v679, %v752
        %v754 = vpop.f32.mrf.mxu0
        %v755 = vadd.f32 %v683, %v754
        %756 = vdwg.mxu0
        %v757 = vxor.u32 %v753, 2147483648
        %v758 = vxor.u32 %v755, 2147483648
        %v759 = vmul.f32 %v757, 1.442695
        %v760 = vpow.pop %v759
        %v761 = vmul.f32 %v758, 1.442695
        %v762 = vpow.pop %v761
        %v763 = vadd.f32 %v760, 1.0
        %v764 = vadd.f32 %v762, 1.0
        %v765 = vrcp.pop %v763
        %v766 = vmul.f32 1.0, %v765
        %v767 = vrcp.pop %v764
        %v768 = vmul.f32 1.0, %v767
        %v769 = vmul.f32 %v766, %v528
        %v770 = vld [vmem:[%s8] sm:$0x1]
        %v772 = vlaneseq
        %v773 = vshrl.u32 %v772, 7
        %v774 = vsub.s32 0, %v773
        %v775 = vrot.slane %v770, %v774
        %777 = vmatprep.subr.mxu0 0.0
        %778 = vmatpush1.msra.mxu0 %v546
        %779 = vmatprep.subr.mxu0 0.0
        %780 = vmatpush1.msra.mxu0 %v545
        %781 = vmatprep.subr.mxu0 0.0
        %782 = vmatpush1.msra.mxu0 %v544
        %783 = vmatprep.subr.mxu0 0.0
        %784 = vmatpush1.msra.mxu0 %v543
        %785 = vmatprep.subr.mxu0 0.0
        %786 = vmatpush1.msra.mxu0 %v542
        %787 = vmatprep.subr.mxu0 0.0
        %788 = vmatpush1.msra.mxu0 %v541
        %789 = vmatprep.subr.mxu0 0.0
        %790 = vmatpush1.msra.mxu0 %v540
        %791 = vmatprep.subr.mxu0 0.0
        %792 = vmatpush1.msra.mxu0 %v539
        %793 = vmatprep.subr.mxu0 0.0
        %794 = vmatpush1.msra.mxu0 %v538
        %795 = vmatprep.subr.mxu0 0.0
        %796 = vmatpush1.msra.mxu0 %v537
        %797 = vmatprep.subr.mxu0 0.0
        %798 = vmatpush1.msra.mxu0 %v536
        %799 = vmatprep.subr.mxu0 0.0
        %800 = vmatpush1.msra.mxu0 %v535
        %801 = vmatprep.subr.mxu0 0.0
        %802 = vmatpush1.msra.mxu0 %v534
        %803 = vmatprep.subr.mxu0 0.0
        %804 = vmatpush1.msra.mxu0 %v533
        %805 = vmatprep.subr.mxu0 0.0
        %806 = vmatpush1.msra.mxu0 %v532
        %807 = vmatprep.subr.mxu0 0.0
        %808 = vmatpush1.msra.mxu0 %v531
        %809 = vmatprep.subr.mxu0 0.0
        %810 = vmatpush2.msra.mxu0 0.0
        %811 = vmatprep.subr.mxu0 0.0
        %812 = vmatpush2.msra.mxu0 0.0
        %813 = vmatprep.subr.mxu0 0.0
        %814 = vmatpush2.msra.mxu0 0.0
        %815 = vmatprep.subr.mxu0 0.0
        %816 = vmatpush2.msra.mxu0 0.0
        %817 = vmatprep.subr.mxu0 0.0
        %818 = vmatpush2.msra.mxu0 0.0
        %819 = vmatprep.subr.mxu0 0.0
        %820 = vmatpush2.msra.mxu0 0.0
        %821 = vmatprep.subr.mxu0 0.0
        %822 = vmatpush2.msra.mxu0 0.0
        %823 = vmatprep.subr.mxu0 0.0
        %824 = vmatpush2.msra.mxu0 0.0
        %825 = vmatprep.subr.mxu0 0.0
        %826 = vmatpush2.msra.mxu0 0.0
        %827 = vmatprep.subr.mxu0 0.0
        %828 = vmatpush2.msra.mxu0 0.0
        %829 = vmatprep.subr.mxu0 0.0
        %830 = vmatpush2.msra.mxu0 0.0
        %831 = vmatprep.subr.mxu0 0.0
        %832 = vmatpush2.msra.mxu0 0.0
        %833 = vmatprep.subr.mxu0 0.0
        %834 = vmatpush2.msra.mxu0 0.0
        %835 = vmatprep.subr.mxu0 0.0
        %836 = vmatpush2.msra.mxu0 0.0
        %837 = vmatprep.subr.mxu0 0.0
        %838 = vmatpush2.msra.mxu0 0.0
        %839 = vmatprep.subr.mxu0 0.0
        %840 = vmatpush2.msra.mxu0 0.0
        %841 = vmatprep.mubr.f32.mxu0 0.0
        %842 = vmatmul.mubr.f32.gmra.mxu0 %v443
        %v843 = vpop.f32.mrf.mxu0
        %v844 = vadd.f32 %v775, %v843
        %v845 = vpop.f32.mrf.mxu0
        %846 = vdwg.mxu0
        %v847 = vadd.f32 %v769, %v844
        %v848 = vsub.f32 %v847, %v444
        %v849 = vmul.f32 %v768, %v848
        %v850 = vadd.f32 %v444, %v849
        %851 = vst [vmem:[%s442] sm:$0xff] %v850
        %s852 = sand.u32 %s238, 1
        %s853 = scalar_lea.sflag [#allocation4], %s852
        %s854 = sand.u32 %s238, 1
        %s855 = smul.addr %s854, 8
        %s856 = scalar_lea.vmem [#allocation13], %s855
        // Predicated region
        $region81: #{path_gru_forward.1} parent=55 // pred_check
          %p857 = pneg %p248
        $region82: #{path_gru_forward.1} parent=55 // pred_check_branch
          %859 = sbr.rel (%p857) target = $region84
        $region83: #{path_gru_forward.1} parent=55 // pred_region
          %s861 = ssub.s32 128, 128
          %862 = vsyncadd %s853, %s861
          %s863 = smul.addr %s31, 128
          %s864 = scalar_lea.hbm %s9, %s863
          %s866 = sshll.u32 %s856, 4
          %s867 = int_to_ptr.vmem [resolvable:$true] %s866
          %869 = dma.vmem_to_hbm [thread:$0]  %s867, 128, %s864, %s853
        $region84: #{path_gru_forward.1} parent=55 // pred_fallthru
          _
      $region56: #{path_gru_forward.1} parent=5 // pred_fallthru
        _
      %p870 = scmp.le.s32.totalorder 2, %s26
      // Predicated region
      $region85: #{path_gru_forward.1} parent=5 // pred_check
        %p871 = pneg %p870
      $region86: #{path_gru_forward.1} parent=5 // pred_check_branch
        %873 = sbr.rel (%p871) target = $region88
      $region87: #{path_gru_forward.1} parent=5 // pred_region
        %s874 = ssub.s32 %s26, 2
        // Predicated region
        $region89: #{path_gru_forward.1} parent=87 // pred_check
          %p875 = pneg %p254
        $region90: #{path_gru_forward.1} parent=87 // pred_check_branch
          %877 = sbr.rel (%p875) target = $region92
        $region91: #{path_gru_forward.1} parent=87 // pred_region
          %s878 = sand.u32 %s239, 1
          %s879 = scalar_lea.sflag [#allocation4], %s878
          %s880 = sand.u32 %s239, 1
          %s881 = smul.addr %s880, 8
          %s882 = scalar_lea.vmem [#allocation13], %s881
          %883 = dma.done %s879, 128
        $region92: #{path_gru_forward.1} parent=87 // pred_fallthru
          _
      $region88: #{path_gru_forward.1} parent=5 // pred_fallthru
        _
    $region6: #{path_gru_forward.1} parent=1 // loop_footer
      %s30 = sadd.s32 1, %s26
    $region7: #{path_gru_forward.1} parent=1 // loop_footer_branch
      %25 = sbr.rel target = $region3
    $region8: #{path_gru_forward.1} parent=1 // loop_exit
      _
    %884 = vsyncpa [#allocation3], 1
    %s885 = scalar_lea.sflag [#allocation3], 1
    %886 = vsyncpa %s885, 1
    %887 = vsyncpa [#allocation6], 1
    %s888 = scalar_lea.sflag [#allocation6], 1
    %889 = vsyncpa %s888, 1
    %890 = vsyncpa [#allocation9], 1
    %891 = vsyncpa [#allocation12], 1
    %892 = vsyncpa [#allocation4], 1
    %s893 = scalar_lea.sflag [#allocation4], 1
    %894 = vsyncpa %s893, 1

</llo_original>
